<compile_context>
chip_gen: v7x
topology: tpu7x:2x2x1
jax: 0.10.0
libtpu: 0.0.40
codegen_flags: <defaults>
</compile_context>

<pallas_src>
import jax
import jax.numpy as jnp
from jax.experimental import pallas as pl
from jax.experimental.pallas import tpu as pltpu  # noqa: F401  (TPU backend)

N = 5          # logical size (torch.randn(5, 5) weights)
SUB = 8        # sublane-aligned row count for x1 / output
LANE = 128     # lane-aligned column / contraction size


def _mm_plus_mm_kernel(x1_ref, s2_ref, x2_ref, o_ref):
    x1 = x1_ref[...]          # (8, 128)
    s2 = s2_ref[...]          # (128, 128), only top-left 5x5 nonzero
    x2 = x2_ref[...]          # (128, 128), only top-left 5x5 nonzero

    # Two MXU matmuls accumulated into a single (8, 128) result.
    acc = jnp.dot(x1, s2, preferred_element_type=jnp.float32)
    acc = acc + jnp.dot(s2[:SUB, :], x2, preferred_element_type=jnp.float32)
    o_ref[...] = acc.astype(o_ref.dtype)


def _pad(a, rows, cols):
    m, n = a.shape
    return jnp.zeros((rows, cols), a.dtype).at[:m, :n].set(a)


@jax.jit
def mm_plus_mm(x1, x2, s2):
    """Computes 2 * (x1@w1 + x1@w2 + w1@x2 + w2@x2) with s2 = 2*(w1+w2)."""
    x1p = _pad(x1, SUB, LANE)
    s2p = _pad(s2, LANE, LANE)
    x2p = _pad(x2, LANE, LANE)

    out_pad = pl.pallas_call(
        _mm_plus_mm_kernel,
        out_shape=jax.ShapeDtypeStruct((SUB, LANE), jnp.float32),
        in_specs=[
            pl.BlockSpec((SUB, LANE), lambda: (0, 0)),
            pl.BlockSpec((LANE, LANE), lambda: (0, 0)),
            pl.BlockSpec((LANE, LANE), lambda: (0, 0)),
        ],
        out_specs=pl.BlockSpec((SUB, LANE), lambda: (0, 0)),
    )(x1p, s2p, x2p)

    return out_pad[:N, :N]


if __name__ == "__main__":
    key = jax.random.PRNGKey(0)
    k1, k2, k3, k4 = jax.random.split(key, 4)

    # "Module parameters" (torch.randn(5, 5) analogues).
    w1 = jax.random.normal(k1, (N, N), dtype=jnp.float32)
    w2 = jax.random.normal(k2, (N, N), dtype=jnp.float32)
    # Parameter-time precompute (module __init__ analogue): fold the 4->2
    # matmul fusion and the final doubling into one weight matrix.
    s2 = 2.0 * (w1 + w2)

    # Inputs: x1, x2 must be (5, 5) for the forward to be shape-consistent.
    x1 = jax.random.normal(k3, (N, N), dtype=jnp.float32)
    x2 = jax.random.normal(k4, (N, N), dtype=jnp.float32)

    out = mm_plus_mm(x1, x2, s2)
    jax.block_until_ready(out)

    # Pure-JAX reference (original four-matmul formulation).
    v5 = x1 @ w1 + x1 @ w2 + w1 @ x2 + w2 @ x2
    ref = v5 + v5
    assert jnp.allclose(out, ref, atol=1e-4, rtol=1e-4), "mismatch vs reference"

    print("KERNEL_OK")
</pallas_src>

<mosaic_0001>
module attributes {stable_mosaic.version = 11 : i64} {
  func.func @_mm_plus_mm_kernel(%arg0: memref<8x128xf32, #tpu.memory_space<vmem>>, %arg1: memref<128x128xf32, #tpu.memory_space<vmem>>, %arg2: memref<128x128xf32, #tpu.memory_space<vmem>>, %arg3: memref<8x128xf32, #tpu.memory_space<vmem>>) attributes {dimension_semantics = [], scalar_prefetch = 0 : i64, scratch_operands = 0 : i64, tpu.core_type = #tpu.core_type<tc>} {
    %c0 = arith.constant 0 : index
    %c0_0 = arith.constant 0 : index
    %0 = vector.load %arg0[%c0, %c0_0] : memref<8x128xf32, #tpu.memory_space<vmem>>, vector<8x128xf32>
    %c0_1 = arith.constant 0 : index
    %c0_2 = arith.constant 0 : index
    %1 = vector.load %arg1[%c0_1, %c0_2] : memref<128x128xf32, #tpu.memory_space<vmem>>, vector<128x128xf32>
    %c0_3 = arith.constant 0 : index
    %c0_4 = arith.constant 0 : index
    %2 = vector.load %arg2[%c0_3, %c0_4] : memref<128x128xf32, #tpu.memory_space<vmem>>, vector<128x128xf32>
    %cst = arith.constant dense<0.000000e+00> : vector<8x128xf32>
    %3 = tpu.matmul %0, %1, %cst {dimension_numbers = #tpu.dot_dimension_numbers<[1], [0], [0], [1], [0, 0, 1, 1], [], []>} : vector<8x128xf32>, vector<128x128xf32>, vector<8x128xf32> -> vector<8x128xf32>
    %4 = vector.extract_strided_slice %1 {offsets = [0, 0], sizes = [8, 128], strides = [1, 1]} : vector<128x128xf32> to vector<8x128xf32>
    %cst_5 = arith.constant dense<0.000000e+00> : vector<8x128xf32>
    %5 = tpu.matmul %4, %2, %cst_5 {dimension_numbers = #tpu.dot_dimension_numbers<[1], [0], [0], [1], [0, 0, 1, 1], [], []>} : vector<8x128xf32>, vector<128x128xf32>, vector<8x128xf32> -> vector<8x128xf32>
    %6 = arith.addf %3, %5 : vector<8x128xf32>
    %c0_6 = arith.constant 0 : index
    %c0_7 = arith.constant 0 : index
    %7 = vector.load %arg3[%c0_6, %c0_7] : memref<8x128xf32, #tpu.memory_space<vmem>>, vector<8x128xf32>
    tpu.vector_store %arg3[%c0_6, %c0_7], %6 {strides = array<i32>} : memref<8x128xf32, #tpu.memory_space<vmem>>, vector<8x128xf32>,
    return
  }
}

</mosaic_0001>

<llo_original>
// kernel: mm_plus_mm.1
$region0: #{mm_plus_mm.1}
  #allocation0 [shape = 'u32[]', space=smem, size = 0x4, offset = 0x4, fixed_abs, tag = 'smem constant byte address 0x4 - core index']
  #allocation1 [shape = 'u32[144,128]{1,0:T(1,128)}', space=vmem, size = 0x12000, scoped, tag = 'internal scratch']
  %s0 = inlined_call_operand.vmem [shape: f32[8,128], index: 0, kind: input, shape index: {}]
  %s1 = inlined_call_operand.vmem [shape: f32[128,128], index: 1, kind: input, shape index: {}]
  %s2 = inlined_call_operand.vmem [shape: f32[128,128], index: 2, kind: input, shape index: {}]
  %s3 = inlined_call_operand.hbm [shape: f32[8,128], index: 3, kind: output, shape index: {}]
  %s4 = sld [smem:[#allocation0]]
  $region22: #{mm_plus_mm.1} parent=0
    _
  %s6 = ssub.s32 1, %s4
  %s7 = scalar_select 0, %s6, %s4
  $region1: #{mm_plus_mm.1} parent=0
    #allocation2 [shape = 'u8[4096]{0}', space=vmem, size = 0x1000, scoped, tag = 'output window, operand 0, single buffered']
    #allocation3 [shape = 's32[1]{0}', space=sflag, size = 0x4, scoped, tag = 'scoped memory for mm_plus_mm.1']
    %8 = vsyncpa [#allocation3], 0
    // Predicated region
    $region2: #{mm_plus_mm.1} parent=1 // pred_check
      _
    $region3: #{mm_plus_mm.1} parent=1 // pred_check_branch
      %10 = sbr.rel (0) target = $region5
    $region4: #{mm_plus_mm.1} parent=1 // pred_region
      _
    $region5: #{mm_plus_mm.1} parent=1 // pred_fallthru
      _
    // Predicated region
    $region6: #{mm_plus_mm.1} parent=1 // pred_check
      _
    $region7: #{mm_plus_mm.1} parent=1 // pred_check_branch
      %12 = sbr.rel (0) target = $region9
    $region8: #{mm_plus_mm.1} parent=1 // pred_region
      _
    $region9: #{mm_plus_mm.1} parent=1 // pred_fallthru
      _
    // Predicated region
    $region10: #{mm_plus_mm.1} parent=1 // pred_check
      _
    $region11: #{mm_plus_mm.1} parent=1 // pred_check_branch
      %14 = sbr.rel (0) target = $region13
    $region12: #{mm_plus_mm.1} parent=1 // pred_region
      _
    $region13: #{mm_plus_mm.1} parent=1 // pred_fallthru
      _
    %v15 = vld [vmem:[%s0] sm:$0xff]
    %v16 = vld [vmem:[%s1] sm:$0xff]
    %v17 = vld [vmem:[%s1 + $0x8] sm:$0xff]
    %v18 = vld [vmem:[%s1 + $0x10] sm:$0xff]
    %v19 = vld [vmem:[%s1 + $0x18] sm:$0xff]
    %v20 = vld [vmem:[%s1 + $0x20] sm:$0xff]
    %v21 = vld [vmem:[%s1 + $0x28] sm:$0xff]
    %v22 = vld [vmem:[%s1 + $0x30] sm:$0xff]
    %v23 = vld [vmem:[%s1 + $0x38] sm:$0xff]
    %v24 = vld [vmem:[%s1 + $0x40] sm:$0xff]
    %v25 = vld [vmem:[%s1 + $0x48] sm:$0xff]
    %v26 = vld [vmem:[%s1 + $0x50] sm:$0xff]
    %v27 = vld [vmem:[%s1 + $0x58] sm:$0xff]
    %v28 = vld [vmem:[%s1 + $0x60] sm:$0xff]
    %v29 = vld [vmem:[%s1 + $0x68] sm:$0xff]
    %v30 = vld [vmem:[%s1 + $0x70] sm:$0xff]
    %v31 = vld [vmem:[%s1 + $0x78] sm:$0xff]
    %v32 = vld [vmem:[%s2] sm:$0xff]
    %v33 = vld [vmem:[%s2 + $0x8] sm:$0xff]
    %v34 = vld [vmem:[%s2 + $0x10] sm:$0xff]
    %v35 = vld [vmem:[%s2 + $0x18] sm:$0xff]
    %v36 = vld [vmem:[%s2 + $0x20] sm:$0xff]
    %v37 = vld [vmem:[%s2 + $0x28] sm:$0xff]
    %v38 = vld [vmem:[%s2 + $0x30] sm:$0xff]
    %v39 = vld [vmem:[%s2 + $0x38] sm:$0xff]
    %v40 = vld [vmem:[%s2 + $0x40] sm:$0xff]
    %v41 = vld [vmem:[%s2 + $0x48] sm:$0xff]
    %v42 = vld [vmem:[%s2 + $0x50] sm:$0xff]
    %v43 = vld [vmem:[%s2 + $0x58] sm:$0xff]
    %v44 = vld [vmem:[%s2 + $0x60] sm:$0xff]
    %v45 = vld [vmem:[%s2 + $0x68] sm:$0xff]
    %v46 = vld [vmem:[%s2 + $0x70] sm:$0xff]
    %v47 = vld [vmem:[%s2 + $0x78] sm:$0xff]
    %48 = vmatprep.subr.mxu0 0.0
    %49 = vmatpush1.msra.mxu0 %v32
    %50 = vmatprep.subr.mxu0 0.0
    %51 = vmatpush1.msra.mxu0 %v33
    %52 = vmatprep.subr.mxu0 0.0
    %53 = vmatpush1.msra.mxu0 %v34
    %54 = vmatprep.subr.mxu0 0.0
    %55 = vmatpush1.msra.mxu0 %v35
    %56 = vmatprep.subr.mxu0 0.0
    %57 = vmatpush1.msra.mxu0 %v36
    %58 = vmatprep.subr.mxu0 0.0
    %59 = vmatpush1.msra.mxu0 %v37
    %60 = vmatprep.subr.mxu0 0.0
    %61 = vmatpush1.msra.mxu0 %v38
    %62 = vmatprep.subr.mxu0 0.0
    %63 = vmatpush1.msra.mxu0 %v39
    %64 = vmatprep.subr.mxu0 0.0
    %65 = vmatpush1.msra.mxu0 %v40
    %66 = vmatprep.subr.mxu0 0.0
    %67 = vmatpush1.msra.mxu0 %v41
    %68 = vmatprep.subr.mxu0 0.0
    %69 = vmatpush1.msra.mxu0 %v42
    %70 = vmatprep.subr.mxu0 0.0
    %71 = vmatpush1.msra.mxu0 %v43
    %72 = vmatprep.subr.mxu0 0.0
    %73 = vmatpush1.msra.mxu0 %v44
    %74 = vmatprep.subr.mxu0 0.0
    %75 = vmatpush1.msra.mxu0 %v45
    %76 = vmatprep.subr.mxu0 0.0
    %77 = vmatpush1.msra.mxu0 %v46
    %78 = vmatprep.subr.mxu0 0.0
    %79 = vmatpush1.msra.mxu0 %v47
    %80 = vmatprep.subr.mxu0 0.0
    %81 = vmatpush1.msra.mxu0 0.0
    %82 = vmatprep.subr.mxu0 0.0
    %83 = vmatpush1.msra.mxu0 0.0
    %84 = vmatprep.subr.mxu0 0.0
    %85 = vmatpush1.msra.mxu0 0.0
    %86 = vmatprep.subr.mxu0 0.0
    %87 = vmatpush1.msra.mxu0 0.0
    %88 = vmatprep.subr.mxu0 0.0
    %89 = vmatpush1.msra.mxu0 0.0
    %90 = vmatprep.subr.mxu0 0.0
    %91 = vmatpush1.msra.mxu0 0.0
    %92 = vmatprep.subr.mxu0 0.0
    %93 = vmatpush1.msra.mxu0 0.0
    %94 = vmatprep.subr.mxu0 0.0
    %95 = vmatpush1.msra.mxu0 0.0
    %96 = vmatprep.subr.mxu0 0.0
    %97 = vmatpush1.msra.mxu0 0.0
    %98 = vmatprep.subr.mxu0 0.0
    %99 = vmatpush1.msra.mxu0 0.0
    %100 = vmatprep.subr.mxu0 0.0
    %101 = vmatpush1.msra.mxu0 0.0
    %102 = vmatprep.subr.mxu0 0.0
    %103 = vmatpush1.msra.mxu0 0.0
    %104 = vmatprep.subr.mxu0 0.0
    %105 = vmatpush1.msra.mxu0 0.0
    %106 = vmatprep.subr.mxu0 0.0
    %107 = vmatpush1.msra.mxu0 0.0
    %108 = vmatprep.subr.mxu0 0.0
    %109 = vmatpush1.msra.mxu0 0.0
    %110 = vmatprep.subr.mxu0 0.0
    %111 = vmatpush1.msra.mxu0 0.0
    %112 = vmatprep.mubr.f32.mxu0 0.0
    %113 = vmatmul.mubr.f32.gmra.mrb[0].mxu0 %v16
    %v114 = vpop.f32.mrb[0].mxu0
    %v115 = vadd.f32 0.0, %v114
    %v116 = vpop.f32.mrb[0].mxu0
    %117 = vdwg.mxu0
    %118 = vmatprep.subr.mxu0 0.0
    %119 = vmatpush1.msra.mxu0 %v16
    %120 = vmatprep.subr.mxu0 0.0
    %121 = vmatpush1.msra.mxu0 %v17
    %122 = vmatprep.subr.mxu0 0.0
    %123 = vmatpush1.msra.mxu0 %v18
    %124 = vmatprep.subr.mxu0 0.0
    %125 = vmatpush1.msra.mxu0 %v19
    %126 = vmatprep.subr.mxu0 0.0
    %127 = vmatpush1.msra.mxu0 %v20
    %128 = vmatprep.subr.mxu0 0.0
    %129 = vmatpush1.msra.mxu0 %v21
    %130 = vmatprep.subr.mxu0 0.0
    %131 = vmatpush1.msra.mxu0 %v22
    %132 = vmatprep.subr.mxu0 0.0
    %133 = vmatpush1.msra.mxu0 %v23
    %134 = vmatprep.subr.mxu0 0.0
    %135 = vmatpush1.msra.mxu0 %v24
    %136 = vmatprep.subr.mxu0 0.0
    %137 = vmatpush1.msra.mxu0 %v25
    %138 = vmatprep.subr.mxu0 0.0
    %139 = vmatpush1.msra.mxu0 %v26
    %140 = vmatprep.subr.mxu0 0.0
    %141 = vmatpush1.msra.mxu0 %v27
    %142 = vmatprep.subr.mxu0 0.0
    %143 = vmatpush1.msra.mxu0 %v28
    %144 = vmatprep.subr.mxu0 0.0
    %145 = vmatpush1.msra.mxu0 %v29
    %146 = vmatprep.subr.mxu0 0.0
    %147 = vmatpush1.msra.mxu0 %v30
    %148 = vmatprep.subr.mxu0 0.0
    %149 = vmatpush1.msra.mxu0 %v31
    %150 = vmatprep.subr.mxu0 0.0
    %151 = vmatpush1.msra.mxu0 0.0
    %152 = vmatprep.subr.mxu0 0.0
    %153 = vmatpush1.msra.mxu0 0.0
    %154 = vmatprep.subr.mxu0 0.0
    %155 = vmatpush1.msra.mxu0 0.0
    %156 = vmatprep.subr.mxu0 0.0
    %157 = vmatpush1.msra.mxu0 0.0
    %158 = vmatprep.subr.mxu0 0.0
    %159 = vmatpush1.msra.mxu0 0.0
    %160 = vmatprep.subr.mxu0 0.0
    %161 = vmatpush1.msra.mxu0 0.0
    %162 = vmatprep.subr.mxu0 0.0
    %163 = vmatpush1.msra.mxu0 0.0
    %164 = vmatprep.subr.mxu0 0.0
    %165 = vmatpush1.msra.mxu0 0.0
    %166 = vmatprep.subr.mxu0 0.0
    %167 = vmatpush1.msra.mxu0 0.0
    %168 = vmatprep.subr.mxu0 0.0
    %169 = vmatpush1.msra.mxu0 0.0
    %170 = vmatprep.subr.mxu0 0.0
    %171 = vmatpush1.msra.mxu0 0.0
    %172 = vmatprep.subr.mxu0 0.0
    %173 = vmatpush1.msra.mxu0 0.0
    %174 = vmatprep.subr.mxu0 0.0
    %175 = vmatpush1.msra.mxu0 0.0
    %176 = vmatprep.subr.mxu0 0.0
    %177 = vmatpush1.msra.mxu0 0.0
    %178 = vmatprep.subr.mxu0 0.0
    %179 = vmatpush1.msra.mxu0 0.0
    %180 = vmatprep.subr.mxu0 0.0
    %181 = vmatpush1.msra.mxu0 0.0
    %182 = vmatprep.mubr.f32.mxu0 0.0
    %183 = vmatmul.mubr.f32.gmra.mrb[0].mxu0 %v15
    %v184 = vpop.f32.mrb[0].mxu0
    %v185 = vadd.f32 %v115, %v184
    %v186 = vpop.f32.mrb[0].mxu0
    %187 = vdwg.mxu0
    %188 = vst [vmem:[#allocation2] sm:$0xff] %v185
    // Predicated region
    $region14: #{mm_plus_mm.1} parent=1 // pred_check
      _
    $region15: #{mm_plus_mm.1} parent=1 // pred_check_branch
      %190 = sbr.rel (0) target = $region17
    $region16: #{mm_plus_mm.1} parent=1 // pred_region
      %s192 = ssub.s32 128, 128
      %193 = vsyncadd [#allocation3], %s192
      %s195 = sshll.u32 [#allocation2], 4
      %s196 = int_to_ptr.vmem [resolvable:$true] %s195
      %198 = dma.vmem_to_hbm [thread:$0]  %s196, 128, %s3, [#allocation3]
    $region17: #{mm_plus_mm.1} parent=1 // pred_fallthru
      _
    // Predicated region
    $region18: #{mm_plus_mm.1} parent=1 // pred_check
      _
    $region19: #{mm_plus_mm.1} parent=1 // pred_check_branch
      %200 = sbr.rel (0) target = $region21
    $region20: #{mm_plus_mm.1} parent=1 // pred_region
      %201 = dma.done [#allocation3], 128
    $region21: #{mm_plus_mm.1} parent=1 // pred_fallthru
      _
    %202 = vsyncpa [#allocation3], 1

</llo_original>
